<compile_context>
chip_gen: v5e
topology: v5e:2x2
jax: 0.10.0
libtpu: 0.0.40
codegen_flags: <defaults>
</compile_context>

<pallas_src>
import functools

import jax
import jax.numpy as jnp
from jax import lax
from jax.experimental import pallas as pl
from jax.experimental.pallas import tpu as pltpu

LANE = 128
SUBLANE = 8


def _round_up(x, m):
    return ((x + m - 1) // m) * m


def _num_tensorcores():
    """Best-effort TensorCore count per device (v7x / megacore -> 2)."""
    try:
        d = jax.devices()[0]
        if d.platform != "tpu":
            return 1
        n = getattr(d, "num_cores", None)
        if isinstance(n, int) and n >= 1:
            return n
        if "v7" in str(getattr(d, "device_kind", "")).lower():
            return 2
    except Exception:
        pass
    return 1


def _pick_chunks(tb):
    # 2-4 independent row chunks (>=64 rows, sublane-aligned) to interleave
    # inside the body; 1 for small tiles.
    for c in (4, 2):
        if tb >= 64 * c and tb % (SUBLANE * c) == 0:
            return c
    return 1


def _recurrence(W, h_chunks, b_chunk, n_steps, epsilon, unroll):
    """Leaky-integrator recurrence over a tuple of independent row chunks."""

    def step(_, hs):
        new = []
        # Chunks are independent -> the LLO scheduler can overlap one chunk's
        # MXU matmul with another chunk's EUP tanh / VPU axpy.
        for h in hs:
            alpha = jnp.dot(h, W, preferred_element_type=jnp.float32)  # MXU
            if b_chunk is not None:
                alpha = alpha + b_chunk                                # VPU
            new.append(h + epsilon * jnp.tanh(alpha))                  # EUP+VPU
        return tuple(new)

    return lax.fori_loop(0, n_steps, step, tuple(h_chunks), unroll=unroll)


def _write_chunks(out_ref, hs, chunk_rows):
    for c, h in enumerate(hs):
        out_ref[c * chunk_rows:(c + 1) * chunk_rows, :] = h.astype(out_ref.dtype)


def _rnn_kernel_folded(w_ref, out_ref, *, n_steps, epsilon, n_chunks, ones_col,
                       unroll):
    W = w_ref[...]                                  # (Np, Np), resident in VMEM
    TB, Np = out_ref.shape
    CH = TB // n_chunks
    # h0: zeros except the two bias "ones" columns.  They stay exactly 1 across
    # steps because columns ones_col / ones_col+1 of W are all-zero and
    # tanh(0) == 0, so the bias rows of W are added to alpha by the matmul.
    col = lax.broadcasted_iota(jnp.int32, (CH, Np), 1)
    ones_mask = (col >= ones_col) & (col < ones_col + 2)
    h0 = jnp.where(ones_mask, jnp.float32(1.0), jnp.float32(0.0))
    hs = _recurrence(W, [h0] * n_chunks, None, n_steps, epsilon, unroll)
    _write_chunks(out_ref, hs, CH)


def _rnn_kernel_bias(w_ref, b_ref, out_ref, *, n_steps, epsilon, n_chunks,
                     unroll):
    W = w_ref[...]
    TB, Np = out_ref.shape
    CH = TB // n_chunks
    # Hoist the (1,Np)->(CH,Np) broadcast out of the loop (JAX does not CSE
    # broadcast_in_dim; inside the loop it would be re-materialized each step).
    b_chunk = jnp.broadcast_to(b_ref[...], (CH, Np))
    h0 = jnp.zeros((CH, Np), jnp.float32)
    hs = _recurrence(W, [h0] * n_chunks, b_chunk, n_steps, epsilon, unroll)
    _write_chunks(out_ref, hs, CH)


def rnn_forward(X, W, b, *, n_steps=30, epsilon=0.01):
    """Pallas TPU implementation of RNN.forward (returns (B, N) float32)."""
    B = X.shape[0]            # X's values are never used, matching the module.
    N = W.shape[0]

    Np = max(LANE, _round_up(N, LANE))         # lane-dense last dim
    fold_bias = (N + 2) <= Np                  # room for the two ones columns?

    # ---- batch tiling / grid ------------------------------------------------
    Bp = _round_up(max(B, 1), SUBLANE)
    num_tc = _num_tensorcores()
    if num_tc > 1 and Bp >= num_tc * SUBLANE:
        # Exactly one parallel grid step per TensorCore.
        TB = _round_up(pl.cdiv(Bp, num_tc), SUBLANE)
        Bp = TB * num_tc
    else:
        TB = Bp                                # single TC: one big block
    MAX_TB = 1024                              # VMEM budget on the out block
    if TB > MAX_TB:
        TB = MAX_TB
        Bp = _round_up(Bp, TB)
    grid = (Bp // TB,)

    n_chunks = _pick_chunks(TB)
    unroll = True if TB <= 128 else 2          # vreg pressure on big tiles

    # ---- padded parameters --------------------------------------------------
    # Zero padding is exact: padded columns of W (and the ones columns) are
    # zero, tanh(0)=0, so padded state columns never move; padded batch rows
    # are sliced away below.
    Wf32 = W.astype(jnp.float32)
    Wp = jnp.zeros((Np, Np), jnp.float32).at[:N, :N].set(Wf32)

    if fold_bias:
        # Split b into bf16 hi/lo halves across two bias rows so the bias
        # survives the MXU's bf16 operand rounding at ~f32 accuracy.
        bf = b.reshape(-1).astype(jnp.float32)
        b_hi = bf.astype(jnp.bfloat16).astype(jnp.float32)
        b_lo = bf - b_hi
        Wp = Wp.at[N, :N].set(b_hi)
        Wp = Wp.at[N + 1, :N].set(b_lo)
        kernel = functools.partial(_rnn_kernel_folded, n_steps=n_steps,
                                   epsilon=epsilon, n_chunks=n_chunks,
                                   ones_col=N, unroll=unroll)
        operands = (Wp,)
        extra_in_specs = []
    else:
        bp = jnp.zeros((1, Np), jnp.float32).at[:, :N].set(
            b.astype(jnp.float32))
        kernel = functools.partial(_rnn_kernel_bias, n_steps=n_steps,
                                   epsilon=epsilon, n_chunks=n_chunks,
                                   unroll=unroll)
        operands = (Wp, bp)
        extra_in_specs = [pl.BlockSpec((1, Np), lambda i: (0, 0))]

    # W is grid-invariant; stop double-buffering it once it gets big.
    if Np >= 1024:
        w_spec = pl.BlockSpec((Np, Np), lambda i: (0, 0),
                              pipeline_mode=pl.Buffered(1))
        w_bufs = 1
    else:
        w_spec = pl.BlockSpec((Np, Np), lambda i: (0, 0))
        w_bufs = 2

    cp_kwargs = {"dimension_semantics": ("parallel",)}
    vmem_need = (w_bufs * Np * Np + 2 * TB * Np + 2 * Np) * 4 + (1 << 20)
    if vmem_need > (16 << 20):
        cp_kwargs["vmem_limit_bytes"] = int(min(vmem_need, 112 << 20))

    cost = pl.CostEstimate(
        flops=2 * n_steps * Bp * Np * Np,
        transcendentals=n_steps * Bp * Np,
        bytes_accessed=(Np * Np + Np + Bp * Np) * 4,
    )

    out_padded = pl.pallas_call(
        kernel,
        out_shape=jax.ShapeDtypeStruct((Bp, Np), jnp.float32),
        grid=grid,
        in_specs=[w_spec] + extra_in_specs,
        out_specs=pl.BlockSpec((TB, Np), lambda i: (i, 0)),
        compiler_params=pltpu.CompilerParams(**cp_kwargs),
        cost_estimate=cost,
    )(*operands)

    return out_padded[:B, :N]


if __name__ == "__main__":
    batch = 2
    n_features = 16        # X's feature dim (unused by the math, as in torch)
    n_neurons = 32
    gamma = 0.001          # unused in forward, kept for parity with the module
    epsilon = 0.01
    n_steps = 30

    key = jax.random.PRNGKey(0)
    kx, kw, kb = jax.random.split(key, 3)

    # Deterministic parameter init (torch.randn equivalents).
    X = jax.random.normal(kx, (batch, n_features), dtype=jnp.float32)
    W = jax.random.normal(kw, (n_neurons, n_neurons), dtype=jnp.float32)
    b = jax.random.normal(kb, (1, n_neurons), dtype=jnp.float32)

    out = rnn_forward(X, W, b, n_steps=n_steps, epsilon=epsilon)
    out = jax.block_until_ready(out)

    # Pure-JAX reference check of the recurrence.  Tolerance allows for the
    # MXU's bf16-decomposed f32 matmul accumulating over 30 steps.
    h = jnp.zeros((batch, n_neurons), jnp.float32)
    for _ in range(n_steps):
        h = h + epsilon * jnp.tanh(h @ W + b)
    assert out.shape == (batch, n_neurons)
    assert jnp.allclose(out, h, atol=1e-4, rtol=1e-4), "mismatch vs reference"

    print("KERNEL_OK")
</pallas_src>

<mosaic_0001>
module attributes {stable_mosaic.version = 11 : i64} {
  func.func @_rnn_kernel_folded(%arg0: i32, %arg1: memref<128x128xf32, #tpu.memory_space<vmem>>, %arg2: memref<8x128xf32, #tpu.memory_space<vmem>>) attributes {dimension_semantics = [#tpu.dimension_semantics<parallel>], iteration_bounds = array<i64: 1>, scalar_prefetch = 0 : i64, scratch_operands = 0 : i64, tpu.core_type = #tpu.core_type<tc>, window_params = [{pipeline_mode = #tpu.pipeline_mode<synchronous>, transform_indices = @transform_0, window_bounds = array<i64: 128, 128>}, {transform_indices = @transform_1, window_bounds = array<i64: 8, 128>}]} {
    %c0 = arith.constant 0 : index
    %c0_0 = arith.constant 0 : index
    %0 = vector.load %arg1[%c0, %c0_0] : memref<128x128xf32, #tpu.memory_space<vmem>>, vector<128x128xf32>
    %1 = tpu.iota {dimensions = array<i32: 1>} : vector<8x128xi32>
    %c32_i32 = arith.constant 32 : i32
    %2 = vector.broadcast %c32_i32 : i32 to vector<8x128xi32>
    %3 = arith.cmpi sge, %1, %2 : vector<8x128xi32>
    %c34_i32 = arith.constant 34 : i32
    %4 = vector.broadcast %c34_i32 : i32 to vector<8x128xi32>
    %5 = arith.cmpi slt, %1, %4 : vector<8x128xi32>
    %6 = arith.andi %3, %5 : vector<8x128xi1>
    %cst = arith.constant 1.000000e+00 : f32
    %cst_1 = arith.constant 0.000000e+00 : f32
    %7 = vector.broadcast %cst : f32 to vector<8x128xf32>
    %8 = vector.broadcast %cst_1 : f32 to vector<8x128xf32>
    %9 = arith.select %6, %7, %8 : vector<8x128xi1>, vector<8x128xf32>
    %c0_i32 = arith.constant 0 : i32
    %cst_2 = arith.constant dense<0.000000e+00> : vector<8x128xf32>
    %10 = tpu.matmul %9, %0, %cst_2 {dimension_numbers = #tpu.dot_dimension_numbers<[1], [0], [0], [1], [0, 0, 1, 1], [], []>} : vector<8x128xf32>, vector<128x128xf32>, vector<8x128xf32> -> vector<8x128xf32>
    %11 = math.tanh %10 : vector<8x128xf32>
    %cst_3 = arith.constant 0.00999999977 : f32
    %12 = vector.broadcast %cst_3 : f32 to vector<8x128xf32>
    %13 = arith.mulf %12, %11 : vector<8x128xf32>
    %14 = arith.addf %9, %13 : vector<8x128xf32>
    %c1_i32 = arith.constant 1 : i32
    %cst_4 = arith.constant dense<0.000000e+00> : vector<8x128xf32>
    %15 = tpu.matmul %14, %0, %cst_4 {dimension_numbers = #tpu.dot_dimension_numbers<[1], [0], [0], [1], [0, 0, 1, 1], [], []>} : vector<8x128xf32>, vector<128x128xf32>, vector<8x128xf32> -> vector<8x128xf32>
    %16 = math.tanh %15 : vector<8x128xf32>
    %cst_5 = arith.constant 0.00999999977 : f32
    %17 = vector.broadcast %cst_5 : f32 to vector<8x128xf32>
    %18 = arith.mulf %17, %16 : vector<8x128xf32>
    %19 = arith.addf %14, %18 : vector<8x128xf32>
    %c2_i32 = arith.constant 2 : i32
    %cst_6 = arith.constant dense<0.000000e+00> : vector<8x128xf32>
    %20 = tpu.matmul %19, %0, %cst_6 {dimension_numbers = #tpu.dot_dimension_numbers<[1], [0], [0], [1], [0, 0, 1, 1], [], []>} : vector<8x128xf32>, vector<128x128xf32>, vector<8x128xf32> -> vector<8x128xf32>
    %21 = math.tanh %20 : vector<8x128xf32>
    %cst_7 = arith.constant 0.00999999977 : f32
    %22 = vector.broadcast %cst_7 : f32 to vector<8x128xf32>
    %23 = arith.mulf %22, %21 : vector<8x128xf32>
    %24 = arith.addf %19, %23 : vector<8x128xf32>
    %c3_i32 = arith.constant 3 : i32
    %cst_8 = arith.constant dense<0.000000e+00> : vector<8x128xf32>
    %25 = tpu.matmul %24, %0, %cst_8 {dimension_numbers = #tpu.dot_dimension_numbers<[1], [0], [0], [1], [0, 0, 1, 1], [], []>} : vector<8x128xf32>, vector<128x128xf32>, vector<8x128xf32> -> vector<8x128xf32>
    %26 = math.tanh %25 : vector<8x128xf32>
    %cst_9 = arith.constant 0.00999999977 : f32
    %27 = vector.broadcast %cst_9 : f32 to vector<8x128xf32>
    %28 = arith.mulf %27, %26 : vector<8x128xf32>
    %29 = arith.addf %24, %28 : vector<8x128xf32>
    %c4_i32 = arith.constant 4 : i32
    %cst_10 = arith.constant dense<0.000000e+00> : vector<8x128xf32>
    %30 = tpu.matmul %29, %0, %cst_10 {dimension_numbers = #tpu.dot_dimension_numbers<[1], [0], [0], [1], [0, 0, 1, 1], [], []>} : vector<8x128xf32>, vector<128x128xf32>, vector<8x128xf32> -> vector<8x128xf32>
    %31 = math.tanh %30 : vector<8x128xf32>
    %cst_11 = arith.constant 0.00999999977 : f32
    %32 = vector.broadcast %cst_11 : f32 to vector<8x128xf32>
    %33 = arith.mulf %32, %31 : vector<8x128xf32>
    %34 = arith.addf %29, %33 : vector<8x128xf32>
    %c5_i32 = arith.constant 5 : i32
    %cst_12 = arith.constant dense<0.000000e+00> : vector<8x128xf32>
    %35 = tpu.matmul %34, %0, %cst_12 {dimension_numbers = #tpu.dot_dimension_numbers<[1], [0], [0], [1], [0, 0, 1, 1], [], []>} : vector<8x128xf32>, vector<128x128xf32>, vector<8x128xf32> -> vector<8x128xf32>
    %36 = math.tanh %35 : vector<8x128xf32>
    %cst_13 = arith.constant 0.00999999977 : f32
    %37 = vector.broadcast %cst_13 : f32 to vector<8x128xf32>
    %38 = arith.mulf %37, %36 : vector<8x128xf32>
    %39 = arith.addf %34, %38 : vector<8x128xf32>
    %c6_i32 = arith.constant 6 : i32
    %cst_14 = arith.constant dense<0.000000e+00> : vector<8x128xf32>
    %40 = tpu.matmul %39, %0, %cst_14 {dimension_numbers = #tpu.dot_dimension_numbers<[1], [0], [0], [1], [0, 0, 1, 1], [], []>} : vector<8x128xf32>, vector<128x128xf32>, vector<8x128xf32> -> vector<8x128xf32>
    %41 = math.tanh %40 : vector<8x128xf32>
    %cst_15 = arith.constant 0.00999999977 : f32
    %42 = vector.broadcast %cst_15 : f32 to vector<8x128xf32>
    %43 = arith.mulf %42, %41 : vector<8x128xf32>
    %44 = arith.addf %39, %43 : vector<8x128xf32>
    %c7_i32 = arith.constant 7 : i32
    %cst_16 = arith.constant dense<0.000000e+00> : vector<8x128xf32>
    %45 = tpu.matmul %44, %0, %cst_16 {dimension_numbers = #tpu.dot_dimension_numbers<[1], [0], [0], [1], [0, 0, 1, 1], [], []>} : vector<8x128xf32>, vector<128x128xf32>, vector<8x128xf32> -> vector<8x128xf32>
    %46 = math.tanh %45 : vector<8x128xf32>
    %cst_17 = arith.constant 0.00999999977 : f32
    %47 = vector.broadcast %cst_17 : f32 to vector<8x128xf32>
    %48 = arith.mulf %47, %46 : vector<8x128xf32>
    %49 = arith.addf %44, %48 : vector<8x128xf32>
    %c8_i32 = arith.constant 8 : i32
    %cst_18 = arith.constant dense<0.000000e+00> : vector<8x128xf32>
    %50 = tpu.matmul %49, %0, %cst_18 {dimension_numbers = #tpu.dot_dimension_numbers<[1], [0], [0], [1], [0, 0, 1, 1], [], []>} : vector<8x128xf32>, vector<128x128xf32>, vector<8x128xf32> -> vector<8x128xf32>
    %51 = math.tanh %50 : vector<8x128xf32>
    %cst_19 = arith.constant 0.00999999977 : f32
    %52 = vector.broadcast %cst_19 : f32 to vector<8x128xf32>
    %53 = arith.mulf %52, %51 : vector<8x128xf32>
    %54 = arith.addf %49, %53 : vector<8x128xf32>
    %c9_i32 = arith.constant 9 : i32
    %cst_20 = arith.constant dense<0.000000e+00> : vector<8x128xf32>
    %55 = tpu.matmul %54, %0, %cst_20 {dimension_numbers = #tpu.dot_dimension_numbers<[1], [0], [0], [1], [0, 0, 1, 1], [], []>} : vector<8x128xf32>, vector<128x128xf32>, vector<8x128xf32> -> vector<8x128xf32>
    %56 = math.tanh %55 : vector<8x128xf32>
    %cst_21 = arith.constant 0.00999999977 : f32
    %57 = vector.broadcast %cst_21 : f32 to vector<8x128xf32>
    %58 = arith.mulf %57, %56 : vector<8x128xf32>
    %59 = arith.addf %54, %58 : vector<8x128xf32>
    %c10_i32 = arith.constant 10 : i32
    %cst_22 = arith.constant dense<0.000000e+00> : vector<8x128xf32>
    %60 = tpu.matmul %59, %0, %cst_22 {dimension_numbers = #tpu.dot_dimension_numbers<[1], [0], [0], [1], [0, 0, 1, 1], [], []>} : vector<8x128xf32>, vector<128x128xf32>, vector<8x128xf32> -> vector<8x128xf32>
    %61 = math.tanh %60 : vector<8x128xf32>
    %cst_23 = arith.constant 0.00999999977 : f32
    %62 = vector.broadcast %cst_23 : f32 to vector<8x128xf32>
    %63 = arith.mulf %62, %61 : vector<8x128xf32>
    %64 = arith.addf %59, %63 : vector<8x128xf32>
    %c11_i32 = arith.constant 11 : i32
    %cst_24 = arith.constant dense<0.000000e+00> : vector<8x128xf32>
    %65 = tpu.matmul %64, %0, %cst_24 {dimension_numbers = #tpu.dot_dimension_numbers<[1], [0], [0], [1], [0, 0, 1, 1], [], []>} : vector<8x128xf32>, vector<128x128xf32>, vector<8x128xf32> -> vector<8x128xf32>
    %66 = math.tanh %65 : vector<8x128xf32>
    %cst_25 = arith.constant 0.00999999977 : f32
    %67 = vector.broadcast %cst_25 : f32 to vector<8x128xf32>
    %68 = arith.mulf %67, %66 : vector<8x128xf32>
    %69 = arith.addf %64, %68 : vector<8x128xf32>
    %c12_i32 = arith.constant 12 : i32
    %cst_26 = arith.constant dense<0.000000e+00> : vector<8x128xf32>
    %70 = tpu.matmul %69, %0, %cst_26 {dimension_numbers = #tpu.dot_dimension_numbers<[1], [0], [0], [1], [0, 0, 1, 1], [], []>} : vector<8x128xf32>, vector<128x128xf32>, vector<8x128xf32> -> vector<8x128xf32>
    %71 = math.tanh %70 : vector<8x128xf32>
    %cst_27 = arith.constant 0.00999999977 : f32
    %72 = vector.broadcast %cst_27 : f32 to vector<8x128xf32>
    %73 = arith.mulf %72, %71 : vector<8x128xf32>
    %74 = arith.addf %69, %73 : vector<8x128xf32>
    %c13_i32 = arith.constant 13 : i32
    %cst_28 = arith.constant dense<0.000000e+00> : vector<8x128xf32>
    %75 = tpu.matmul %74, %0, %cst_28 {dimension_numbers = #tpu.dot_dimension_numbers<[1], [0], [0], [1], [0, 0, 1, 1], [], []>} : vector<8x128xf32>, vector<128x128xf32>, vector<8x128xf32> -> vector<8x128xf32>
    %76 = math.tanh %75 : vector<8x128xf32>
    %cst_29 = arith.constant 0.00999999977 : f32
    %77 = vector.broadcast %cst_29 : f32 to vector<8x128xf32>
    %78 = arith.mulf %77, %76 : vector<8x128xf32>
    %79 = arith.addf %74, %78 : vector<8x128xf32>
    %c14_i32 = arith.constant 14 : i32
    %cst_30 = arith.constant dense<0.000000e+00> : vector<8x128xf32>
    %80 = tpu.matmul %79, %0, %cst_30 {dimension_numbers = #tpu.dot_dimension_numbers<[1], [0], [0], [1], [0, 0, 1, 1], [], []>} : vector<8x128xf32>, vector<128x128xf32>, vector<8x128xf32> -> vector<8x128xf32>
    %81 = math.tanh %80 : vector<8x128xf32>
    %cst_31 = arith.constant 0.00999999977 : f32
    %82 = vector.broadcast %cst_31 : f32 to vector<8x128xf32>
    %83 = arith.mulf %82, %81 : vector<8x128xf32>
    %84 = arith.addf %79, %83 : vector<8x128xf32>
    %c15_i32 = arith.constant 15 : i32
    %cst_32 = arith.constant dense<0.000000e+00> : vector<8x128xf32>
    %85 = tpu.matmul %84, %0, %cst_32 {dimension_numbers = #tpu.dot_dimension_numbers<[1], [0], [0], [1], [0, 0, 1, 1], [], []>} : vector<8x128xf32>, vector<128x128xf32>, vector<8x128xf32> -> vector<8x128xf32>
    %86 = math.tanh %85 : vector<8x128xf32>
    %cst_33 = arith.constant 0.00999999977 : f32
    %87 = vector.broadcast %cst_33 : f32 to vector<8x128xf32>
    %88 = arith.mulf %87, %86 : vector<8x128xf32>
    %89 = arith.addf %84, %88 : vector<8x128xf32>
    %c16_i32 = arith.constant 16 : i32
    %cst_34 = arith.constant dense<0.000000e+00> : vector<8x128xf32>
    %90 = tpu.matmul %89, %0, %cst_34 {dimension_numbers = #tpu.dot_dimension_numbers<[1], [0], [0], [1], [0, 0, 1, 1], [], []>} : vector<8x128xf32>, vector<128x128xf32>, vector<8x128xf32> -> vector<8x128xf32>
    %91 = math.tanh %90 : vector<8x128xf32>
    %cst_35 = arith.constant 0.00999999977 : f32
    %92 = vector.broadcast %cst_35 : f32 to vector<8x128xf32>
    %93 = arith.mulf %92, %91 : vector<8x128xf32>
    %94 = arith.addf %89, %93 : vector<8x128xf32>
    %c17_i32 = arith.constant 17 : i32
    %cst_36 = arith.constant dense<0.000000e+00> : vector<8x128xf32>
    %95 = tpu.matmul %94, %0, %cst_36 {dimension_numbers = #tpu.dot_dimension_numbers<[1], [0], [0], [1], [0, 0, 1, 1], [], []>} : vector<8x128xf32>, vector<128x128xf32>, vector<8x128xf32> -> vector<8x128xf32>
    %96 = math.tanh %95 : vector<8x128xf32>
    %cst_37 = arith.constant 0.00999999977 : f32
    %97 = vector.broadcast %cst_37 : f32 to vector<8x128xf32>
    %98 = arith.mulf %97, %96 : vector<8x128xf32>
    %99 = arith.addf %94, %98 : vector<8x128xf32>
    %c18_i32 = arith.constant 18 : i32
    %cst_38 = arith.constant dense<0.000000e+00> : vector<8x128xf32>
    %100 = tpu.matmul %99, %0, %cst_38 {dimension_numbers = #tpu.dot_dimension_numbers<[1], [0], [0], [1], [0, 0, 1, 1], [], []>} : vector<8x128xf32>, vector<128x128xf32>, vector<8x128xf32> -> vector<8x128xf32>
    %101 = math.tanh %100 : vector<8x128xf32>
    %cst_39 = arith.constant 0.00999999977 : f32
    %102 = vector.broadcast %cst_39 : f32 to vector<8x128xf32>
    %103 = arith.mulf %102, %101 : vector<8x128xf32>
    %104 = arith.addf %99, %103 : vector<8x128xf32>
    %c19_i32 = arith.constant 19 : i32
    %cst_40 = arith.constant dense<0.000000e+00> : vector<8x128xf32>
    %105 = tpu.matmul %104, %0, %cst_40 {dimension_numbers = #tpu.dot_dimension_numbers<[1], [0], [0], [1], [0, 0, 1, 1], [], []>} : vector<8x128xf32>, vector<128x128xf32>, vector<8x128xf32> -> vector<8x128xf32>
    %106 = math.tanh %105 : vector<8x128xf32>
    %cst_41 = arith.constant 0.00999999977 : f32
    %107 = vector.broadcast %cst_41 : f32 to vector<8x128xf32>
    %108 = arith.mulf %107, %106 : vector<8x128xf32>
    %109 = arith.addf %104, %108 : vector<8x128xf32>
    %c20_i32 = arith.constant 20 : i32
    %cst_42 = arith.constant dense<0.000000e+00> : vector<8x128xf32>
    %110 = tpu.matmul %109, %0, %cst_42 {dimension_numbers = #tpu.dot_dimension_numbers<[1], [0], [0], [1], [0, 0, 1, 1], [], []>} : vector<8x128xf32>, vector<128x128xf32>, vector<8x128xf32> -> vector<8x128xf32>
    %111 = math.tanh %110 : vector<8x128xf32>
    %cst_43 = arith.constant 0.00999999977 : f32
    %112 = vector.broadcast %cst_43 : f32 to vector<8x128xf32>
    %113 = arith.mulf %112, %111 : vector<8x128xf32>
    %114 = arith.addf %109, %113 : vector<8x128xf32>
    %c21_i32 = arith.constant 21 : i32
    %cst_44 = arith.constant dense<0.000000e+00> : vector<8x128xf32>
    %115 = tpu.matmul %114, %0, %cst_44 {dimension_numbers = #tpu.dot_dimension_numbers<[1], [0], [0], [1], [0, 0, 1, 1], [], []>} : vector<8x128xf32>, vector<128x128xf32>, vector<8x128xf32> -> vector<8x128xf32>
    %116 = math.tanh %115 : vector<8x128xf32>
    %cst_45 = arith.constant 0.00999999977 : f32
    %117 = vector.broadcast %cst_45 : f32 to vector<8x128xf32>
    %118 = arith.mulf %117, %116 : vector<8x128xf32>
    %119 = arith.addf %114, %118 : vector<8x128xf32>
    %c22_i32 = arith.constant 22 : i32
    %cst_46 = arith.constant dense<0.000000e+00> : vector<8x128xf32>
    %120 = tpu.matmul %119, %0, %cst_46 {dimension_numbers = #tpu.dot_dimension_numbers<[1], [0], [0], [1], [0, 0, 1, 1], [], []>} : vector<8x128xf32>, vector<128x128xf32>, vector<8x128xf32> -> vector<8x128xf32>
    %121 = math.tanh %120 : vector<8x128xf32>
    %cst_47 = arith.constant 0.00999999977 : f32
    %122 = vector.broadcast %cst_47 : f32 to vector<8x128xf32>
    %123 = arith.mulf %122, %121 : vector<8x128xf32>
    %124 = arith.addf %119, %123 : vector<8x128xf32>
    %c23_i32 = arith.constant 23 : i32
    %cst_48 = arith.constant dense<0.000000e+00> : vector<8x128xf32>
    %125 = tpu.matmul %124, %0, %cst_48 {dimension_numbers = #tpu.dot_dimension_numbers<[1], [0], [0], [1], [0, 0, 1, 1], [], []>} : vector<8x128xf32>, vector<128x128xf32>, vector<8x128xf32> -> vector<8x128xf32>
    %126 = math.tanh %125 : vector<8x128xf32>
    %cst_49 = arith.constant 0.00999999977 : f32
    %127 = vector.broadcast %cst_49 : f32 to vector<8x128xf32>
    %128 = arith.mulf %127, %126 : vector<8x128xf32>
    %129 = arith.addf %124, %128 : vector<8x128xf32>
    %c24_i32 = arith.constant 24 : i32
    %cst_50 = arith.constant dense<0.000000e+00> : vector<8x128xf32>
    %130 = tpu.matmul %129, %0, %cst_50 {dimension_numbers = #tpu.dot_dimension_numbers<[1], [0], [0], [1], [0, 0, 1, 1], [], []>} : vector<8x128xf32>, vector<128x128xf32>, vector<8x128xf32> -> vector<8x128xf32>
    %131 = math.tanh %130 : vector<8x128xf32>
    %cst_51 = arith.constant 0.00999999977 : f32
    %132 = vector.broadcast %cst_51 : f32 to vector<8x128xf32>
    %133 = arith.mulf %132, %131 : vector<8x128xf32>
    %134 = arith.addf %129, %133 : vector<8x128xf32>
    %c25_i32 = arith.constant 25 : i32
    %cst_52 = arith.constant dense<0.000000e+00> : vector<8x128xf32>
    %135 = tpu.matmul %134, %0, %cst_52 {dimension_numbers = #tpu.dot_dimension_numbers<[1], [0], [0], [1], [0, 0, 1, 1], [], []>} : vector<8x128xf32>, vector<128x128xf32>, vector<8x128xf32> -> vector<8x128xf32>
    %136 = math.tanh %135 : vector<8x128xf32>
    %cst_53 = arith.constant 0.00999999977 : f32
    %137 = vector.broadcast %cst_53 : f32 to vector<8x128xf32>
    %138 = arith.mulf %137, %136 : vector<8x128xf32>
    %139 = arith.addf %134, %138 : vector<8x128xf32>
    %c26_i32 = arith.constant 26 : i32
    %cst_54 = arith.constant dense<0.000000e+00> : vector<8x128xf32>
    %140 = tpu.matmul %139, %0, %cst_54 {dimension_numbers = #tpu.dot_dimension_numbers<[1], [0], [0], [1], [0, 0, 1, 1], [], []>} : vector<8x128xf32>, vector<128x128xf32>, vector<8x128xf32> -> vector<8x128xf32>
    %141 = math.tanh %140 : vector<8x128xf32>
    %cst_55 = arith.constant 0.00999999977 : f32
    %142 = vector.broadcast %cst_55 : f32 to vector<8x128xf32>
    %143 = arith.mulf %142, %141 : vector<8x128xf32>
    %144 = arith.addf %139, %143 : vector<8x128xf32>
    %c27_i32 = arith.constant 27 : i32
    %cst_56 = arith.constant dense<0.000000e+00> : vector<8x128xf32>
    %145 = tpu.matmul %144, %0, %cst_56 {dimension_numbers = #tpu.dot_dimension_numbers<[1], [0], [0], [1], [0, 0, 1, 1], [], []>} : vector<8x128xf32>, vector<128x128xf32>, vector<8x128xf32> -> vector<8x128xf32>
    %146 = math.tanh %145 : vector<8x128xf32>
    %cst_57 = arith.constant 0.00999999977 : f32
    %147 = vector.broadcast %cst_57 : f32 to vector<8x128xf32>
    %148 = arith.mulf %147, %146 : vector<8x128xf32>
    %149 = arith.addf %144, %148 : vector<8x128xf32>
    %c28_i32 = arith.constant 28 : i32
    %cst_58 = arith.constant dense<0.000000e+00> : vector<8x128xf32>
    %150 = tpu.matmul %149, %0, %cst_58 {dimension_numbers = #tpu.dot_dimension_numbers<[1], [0], [0], [1], [0, 0, 1, 1], [], []>} : vector<8x128xf32>, vector<128x128xf32>, vector<8x128xf32> -> vector<8x128xf32>
    %151 = math.tanh %150 : vector<8x128xf32>
    %cst_59 = arith.constant 0.00999999977 : f32
    %152 = vector.broadcast %cst_59 : f32 to vector<8x128xf32>
    %153 = arith.mulf %152, %151 : vector<8x128xf32>
    %154 = arith.addf %149, %153 : vector<8x128xf32>
    %c29_i32 = arith.constant 29 : i32
    %cst_60 = arith.constant dense<0.000000e+00> : vector<8x128xf32>
    %155 = tpu.matmul %154, %0, %cst_60 {dimension_numbers = #tpu.dot_dimension_numbers<[1], [0], [0], [1], [0, 0, 1, 1], [], []>} : vector<8x128xf32>, vector<128x128xf32>, vector<8x128xf32> -> vector<8x128xf32>
    %156 = math.tanh %155 : vector<8x128xf32>
    %cst_61 = arith.constant 0.00999999977 : f32
    %157 = vector.broadcast %cst_61 : f32 to vector<8x128xf32>
    %158 = arith.mulf %157, %156 : vector<8x128xf32>
    %159 = arith.addf %154, %158 : vector<8x128xf32>
    %c0_62 = arith.constant 0 : index
    %c0_63 = arith.constant 0 : index
    %160 = vector.load %arg2[%c0_62, %c0_63] : memref<8x128xf32, #tpu.memory_space<vmem>>, vector<8x128xf32>
    tpu.vector_store %arg2[%c0_62, %c0_63], %159 {strides = array<i32>} : memref<8x128xf32, #tpu.memory_space<vmem>>, vector<8x128xf32>,
    return
  }
  func.func @transform_0(%arg0: i32) -> (i32, i32) {
    %c0_i32 = arith.constant 0 : i32
    %c0_i32_0 = arith.constant 0 : i32
    %c0_i32_1 = arith.constant 0 : i32
    return %c0_i32, %c0_i32_0 : i32, i32
  }
  func.func @transform_1(%arg0: i32) -> (i32, i32) {
    %c0_i32 = arith.constant 0 : i32
    %c0_i32_0 = arith.constant 0 : i32
    return %arg0, %c0_i32 : i32, i32
  }
}

</mosaic_0001>

<llo_original>
// kernel: tpu_custom_call.1
$region0: #{tpu_custom_call.1}
  #allocation0 [shape = 'u32[]', space=smem, size = 0x4, offset = 0x4, fixed_abs, tag = 'smem constant byte address 0x4 - core index']
  #allocation1 [shape = 'u32[72,128]{1,0:T(1,128)}', space=vmem, size = 0x9000, scoped, tag = 'internal scratch']
  %s0 = inlined_call_operand.hbm [shape: f32[128,128], index: 0, kind: input, shape index: {}]
  %s1 = inlined_call_operand.hbm [shape: f32[8,128], index: 1, kind: output, shape index: {}]
  %s2 = sld [smem:[#allocation0]]
  $region18: #{tpu_custom_call.1} parent=0
    _
  %s4 = ssub.s32 1, %s2
  %s5 = scalar_select 0, %s4, %s2
  $region1: #{tpu_custom_call.1} parent=0
    #allocation2 [shape = 'u8[65536]{0}', space=vmem, size = 0x10000, scoped, tag = 'input window, operand 0, single buffered']
    #allocation3 [shape = 's32[1]{0}', space=sflag, size = 0x4, scoped, tag = 'scoped memory for tpu_custom_call.1']
    #allocation4 [shape = 's32[1]{0}', space=sflag, size = 0x4, scoped, tag = 'scoped memory for tpu_custom_call.1']
    #allocation5 [shape = 'u8[4096]{0}', space=vmem, size = 0x1000, scoped, tag = 'output window, operand 0, single buffered']
    %6 = vsyncpa [#allocation3], 0
    %7 = vsyncpa [#allocation4], 0
    // Predicated region
    $region2: #{tpu_custom_call.1} parent=1 // pred_check
      _
    $region3: #{tpu_custom_call.1} parent=1 // pred_check_branch
      %9 = sbr.rel (0) target = $region5
    $region4: #{tpu_custom_call.1} parent=1 // pred_region
      %11 = vsyncadd [#allocation3], 0
      %s12 = sshll.u32 %s0, 4
      %s13 = int_to_ptr.hbm [resolvable:$true] %s12
      %s14 = sshll.u32 [#allocation2], 4
      %s15 = int_to_ptr.vmem [resolvable:$true] %s14
      %20 = dma.hbm_to_vmem [thread:$0]  %s13, 2048, %s15, [#allocation3], 128, 128, 8
    $region5: #{tpu_custom_call.1} parent=1 // pred_fallthru
      _
    // Predicated region
    $region6: #{tpu_custom_call.1} parent=1 // pred_check
      _
    $region7: #{tpu_custom_call.1} parent=1 // pred_check_branch
      %22 = sbr.rel (0) target = $region9
    $region8: #{tpu_custom_call.1} parent=1 // pred_region
      %24 = dma.done [#allocation3], 2048
    $region9: #{tpu_custom_call.1} parent=1 // pred_fallthru
      _
    %v25 = vld [vmem:[#allocation2] sm:$0xff]
    %v26 = vld [vmem:[#allocation2 + $0x8] sm:$0xff]
    %v27 = vld [vmem:[#allocation2 + $0x10] sm:$0xff]
    %v28 = vld [vmem:[#allocation2 + $0x18] sm:$0xff]
    %v29 = vld [vmem:[#allocation2 + $0x20] sm:$0xff]
    %v30 = vld [vmem:[#allocation2 + $0x28] sm:$0xff]
    %v31 = vld [vmem:[#allocation2 + $0x30] sm:$0xff]
    %v32 = vld [vmem:[#allocation2 + $0x38] sm:$0xff]
    %v33 = vld [vmem:[#allocation2 + $0x40] sm:$0xff]
    %v34 = vld [vmem:[#allocation2 + $0x48] sm:$0xff]
    %v35 = vld [vmem:[#allocation2 + $0x50] sm:$0xff]
    %v36 = vld [vmem:[#allocation2 + $0x58] sm:$0xff]
    %v37 = vld [vmem:[#allocation2 + $0x60] sm:$0xff]
    %v38 = vld [vmem:[#allocation2 + $0x68] sm:$0xff]
    %v39 = vld [vmem:[#allocation2 + $0x70] sm:$0xff]
    %v40 = vld [vmem:[#allocation2 + $0x78] sm:$0xff]
    %v41 = vlaneseq
    %v42 = vand.u32 %v41, 127
    %vm43 = vcmp.ge.s32.totalorder %v42, 32
    %vm44 = vcmp.lt.s32.totalorder %v42, 34
    %vm45 = vmand %vm43, %vm44
    %v46 = vsel %vm45, 1.0, 0.0
    %47 = vmatpush.msra.mxu0 %v40
    %48 = vmatpush.msra.mxu0 %v39
    %49 = vmatpush.msra.mxu0 %v38
    %50 = vmatpush.msra.mxu0 %v37
    %51 = vmatpush.msra.mxu0 %v36
    %52 = vmatpush.msra.mxu0 %v35
    %53 = vmatpush.msra.mxu0 %v34
    %54 = vmatpush.msra.mxu0 %v33
    %55 = vmatpush.msra.mxu0 %v32
    %56 = vmatpush.msra.mxu0 %v31
    %57 = vmatpush.msra.mxu0 %v30
    %58 = vmatpush.msra.mxu0 %v29
    %59 = vmatpush.msra.mxu0 %v28
    %60 = vmatpush.msra.mxu0 %v27
    %61 = vmatpush.msra.mxu0 %v26
    %62 = vmatpush.msra.mxu0 %v25
    %63 = vmatmul.f32.gmra.mxu0 %v46
    %v64 = vpop.f32.mrf.mxu0
    %v65 = vadd.f32 0.0, %v64
    %66 = vdwg.mxu0
    %v67 = vtanh.pop %v65
    %v68 = vmul.f32 %v67, 0.01
    %v69 = vadd.f32 %v46, %v68
    %70 = vmatpush.msra.mxu0 %v40
    %71 = vmatpush.msra.mxu0 %v39
    %72 = vmatpush.msra.mxu0 %v38
    %73 = vmatpush.msra.mxu0 %v37
    %74 = vmatpush.msra.mxu0 %v36
    %75 = vmatpush.msra.mxu0 %v35
    %76 = vmatpush.msra.mxu0 %v34
    %77 = vmatpush.msra.mxu0 %v33
    %78 = vmatpush.msra.mxu0 %v32
    %79 = vmatpush.msra.mxu0 %v31
    %80 = vmatpush.msra.mxu0 %v30
    %81 = vmatpush.msra.mxu0 %v29
    %82 = vmatpush.msra.mxu0 %v28
    %83 = vmatpush.msra.mxu0 %v27
    %84 = vmatpush.msra.mxu0 %v26
    %85 = vmatpush.msra.mxu0 %v25
    %86 = vmatmul.f32.gmra.mxu0 %v69
    %v87 = vpop.f32.mrf.mxu0
    %v88 = vadd.f32 0.0, %v87
    %89 = vdwg.mxu0
    %v90 = vtanh.pop %v88
    %v91 = vmul.f32 %v90, 0.01
    %v92 = vadd.f32 %v69, %v91
    %93 = vmatpush.msra.mxu0 %v40
    %94 = vmatpush.msra.mxu0 %v39
    %95 = vmatpush.msra.mxu0 %v38
    %96 = vmatpush.msra.mxu0 %v37
    %97 = vmatpush.msra.mxu0 %v36
    %98 = vmatpush.msra.mxu0 %v35
    %99 = vmatpush.msra.mxu0 %v34
    %100 = vmatpush.msra.mxu0 %v33
    %101 = vmatpush.msra.mxu0 %v32
    %102 = vmatpush.msra.mxu0 %v31
    %103 = vmatpush.msra.mxu0 %v30
    %104 = vmatpush.msra.mxu0 %v29
    %105 = vmatpush.msra.mxu0 %v28
    %106 = vmatpush.msra.mxu0 %v27
    %107 = vmatpush.msra.mxu0 %v26
    %108 = vmatpush.msra.mxu0 %v25
    %109 = vmatmul.f32.gmra.mxu0 %v92
    %v110 = vpop.f32.mrf.mxu0
    %v111 = vadd.f32 0.0, %v110
    %112 = vdwg.mxu0
    %v113 = vtanh.pop %v111
    %v114 = vmul.f32 %v113, 0.01
    %v115 = vadd.f32 %v92, %v114
    %116 = vmatpush.msra.mxu0 %v40
    %117 = vmatpush.msra.mxu0 %v39
    %118 = vmatpush.msra.mxu0 %v38
    %119 = vmatpush.msra.mxu0 %v37
    %120 = vmatpush.msra.mxu0 %v36
    %121 = vmatpush.msra.mxu0 %v35
    %122 = vmatpush.msra.mxu0 %v34
    %123 = vmatpush.msra.mxu0 %v33
    %124 = vmatpush.msra.mxu0 %v32
    %125 = vmatpush.msra.mxu0 %v31
    %126 = vmatpush.msra.mxu0 %v30
    %127 = vmatpush.msra.mxu0 %v29
    %128 = vmatpush.msra.mxu0 %v28
    %129 = vmatpush.msra.mxu0 %v27
    %130 = vmatpush.msra.mxu0 %v26
    %131 = vmatpush.msra.mxu0 %v25
    %132 = vmatmul.f32.gmra.mxu0 %v115
    %v133 = vpop.f32.mrf.mxu0
    %v134 = vadd.f32 0.0, %v133
    %135 = vdwg.mxu0
    %v136 = vtanh.pop %v134
    %v137 = vmul.f32 %v136, 0.01
    %v138 = vadd.f32 %v115, %v137
    %139 = vmatpush.msra.mxu0 %v40
    %140 = vmatpush.msra.mxu0 %v39
    %141 = vmatpush.msra.mxu0 %v38
    %142 = vmatpush.msra.mxu0 %v37
    %143 = vmatpush.msra.mxu0 %v36
    %144 = vmatpush.msra.mxu0 %v35
    %145 = vmatpush.msra.mxu0 %v34
    %146 = vmatpush.msra.mxu0 %v33
    %147 = vmatpush.msra.mxu0 %v32
    %148 = vmatpush.msra.mxu0 %v31
    %149 = vmatpush.msra.mxu0 %v30
    %150 = vmatpush.msra.mxu0 %v29
    %151 = vmatpush.msra.mxu0 %v28
    %152 = vmatpush.msra.mxu0 %v27
    %153 = vmatpush.msra.mxu0 %v26
    %154 = vmatpush.msra.mxu0 %v25
    %155 = vmatmul.f32.gmra.mxu0 %v138
    %v156 = vpop.f32.mrf.mxu0
    %v157 = vadd.f32 0.0, %v156
    %158 = vdwg.mxu0
    %v159 = vtanh.pop %v157
    %v160 = vmul.f32 %v159, 0.01
    %v161 = vadd.f32 %v138, %v160
    %162 = vmatpush.msra.mxu0 %v40
    %163 = vmatpush.msra.mxu0 %v39
    %164 = vmatpush.msra.mxu0 %v38
    %165 = vmatpush.msra.mxu0 %v37
    %166 = vmatpush.msra.mxu0 %v36
    %167 = vmatpush.msra.mxu0 %v35
    %168 = vmatpush.msra.mxu0 %v34
    %169 = vmatpush.msra.mxu0 %v33
    %170 = vmatpush.msra.mxu0 %v32
    %171 = vmatpush.msra.mxu0 %v31
    %172 = vmatpush.msra.mxu0 %v30
    %173 = vmatpush.msra.mxu0 %v29
    %174 = vmatpush.msra.mxu0 %v28
    %175 = vmatpush.msra.mxu0 %v27
    %176 = vmatpush.msra.mxu0 %v26
    %177 = vmatpush.msra.mxu0 %v25
    %178 = vmatmul.f32.gmra.mxu0 %v161
    %v179 = vpop.f32.mrf.mxu0
    %v180 = vadd.f32 0.0, %v179
    %181 = vdwg.mxu0
    %v182 = vtanh.pop %v180
    %v183 = vmul.f32 %v182, 0.01
    %v184 = vadd.f32 %v161, %v183
    %185 = vmatpush.msra.mxu0 %v40
    %186 = vmatpush.msra.mxu0 %v39
    %187 = vmatpush.msra.mxu0 %v38
    %188 = vmatpush.msra.mxu0 %v37
    %189 = vmatpush.msra.mxu0 %v36
    %190 = vmatpush.msra.mxu0 %v35
    %191 = vmatpush.msra.mxu0 %v34
    %192 = vmatpush.msra.mxu0 %v33
    %193 = vmatpush.msra.mxu0 %v32
    %194 = vmatpush.msra.mxu0 %v31
    %195 = vmatpush.msra.mxu0 %v30
    %196 = vmatpush.msra.mxu0 %v29
    %197 = vmatpush.msra.mxu0 %v28
    %198 = vmatpush.msra.mxu0 %v27
    %199 = vmatpush.msra.mxu0 %v26
    %200 = vmatpush.msra.mxu0 %v25
    %201 = vmatmul.f32.gmra.mxu0 %v184
    %v202 = vpop.f32.mrf.mxu0
    %v203 = vadd.f32 0.0, %v202
    %204 = vdwg.mxu0
    %v205 = vtanh.pop %v203
    %v206 = vmul.f32 %v205, 0.01
    %v207 = vadd.f32 %v184, %v206
    %208 = vmatpush.msra.mxu0 %v40
    %209 = vmatpush.msra.mxu0 %v39
    %210 = vmatpush.msra.mxu0 %v38
    %211 = vmatpush.msra.mxu0 %v37
    %212 = vmatpush.msra.mxu0 %v36
    %213 = vmatpush.msra.mxu0 %v35
    %214 = vmatpush.msra.mxu0 %v34
    %215 = vmatpush.msra.mxu0 %v33
    %216 = vmatpush.msra.mxu0 %v32
    %217 = vmatpush.msra.mxu0 %v31
    %218 = vmatpush.msra.mxu0 %v30
    %219 = vmatpush.msra.mxu0 %v29
    %220 = vmatpush.msra.mxu0 %v28
    %221 = vmatpush.msra.mxu0 %v27
    %222 = vmatpush.msra.mxu0 %v26
    %223 = vmatpush.msra.mxu0 %v25
    %224 = vmatmul.f32.gmra.mxu0 %v207
    %v225 = vpop.f32.mrf.mxu0
    %v226 = vadd.f32 0.0, %v225
    %227 = vdwg.mxu0
    %v228 = vtanh.pop %v226
    %v229 = vmul.f32 %v228, 0.01
    %v230 = vadd.f32 %v207, %v229
    %231 = vmatpush.msra.mxu0 %v40
    %232 = vmatpush.msra.mxu0 %v39
    %233 = vmatpush.msra.mxu0 %v38
    %234 = vmatpush.msra.mxu0 %v37
    %235 = vmatpush.msra.mxu0 %v36
    %236 = vmatpush.msra.mxu0 %v35
    %237 = vmatpush.msra.mxu0 %v34
    %238 = vmatpush.msra.mxu0 %v33
    %239 = vmatpush.msra.mxu0 %v32
    %240 = vmatpush.msra.mxu0 %v31
    %241 = vmatpush.msra.mxu0 %v30
    %242 = vmatpush.msra.mxu0 %v29
    %243 = vmatpush.msra.mxu0 %v28
    %244 = vmatpush.msra.mxu0 %v27
    %245 = vmatpush.msra.mxu0 %v26
    %246 = vmatpush.msra.mxu0 %v25
    %247 = vmatmul.f32.gmra.mxu0 %v230
    %v248 = vpop.f32.mrf.mxu0
    %v249 = vadd.f32 0.0, %v248
    %250 = vdwg.mxu0
    %v251 = vtanh.pop %v249
    %v252 = vmul.f32 %v251, 0.01
    %v253 = vadd.f32 %v230, %v252
    %254 = vmatpush.msra.mxu0 %v40
    %255 = vmatpush.msra.mxu0 %v39
    %256 = vmatpush.msra.mxu0 %v38
    %257 = vmatpush.msra.mxu0 %v37
    %258 = vmatpush.msra.mxu0 %v36
    %259 = vmatpush.msra.mxu0 %v35
    %260 = vmatpush.msra.mxu0 %v34
    %261 = vmatpush.msra.mxu0 %v33
    %262 = vmatpush.msra.mxu0 %v32
    %263 = vmatpush.msra.mxu0 %v31
    %264 = vmatpush.msra.mxu0 %v30
    %265 = vmatpush.msra.mxu0 %v29
    %266 = vmatpush.msra.mxu0 %v28
    %267 = vmatpush.msra.mxu0 %v27
    %268 = vmatpush.msra.mxu0 %v26
    %269 = vmatpush.msra.mxu0 %v25
    %270 = vmatmul.f32.gmra.mxu0 %v253
    %v271 = vpop.f32.mrf.mxu0
    %v272 = vadd.f32 0.0, %v271
    %273 = vdwg.mxu0
    %v274 = vtanh.pop %v272
    %v275 = vmul.f32 %v274, 0.01
    %v276 = vadd.f32 %v253, %v275
    %277 = vmatpush.msra.mxu0 %v40
    %278 = vmatpush.msra.mxu0 %v39
    %279 = vmatpush.msra.mxu0 %v38
    %280 = vmatpush.msra.mxu0 %v37
    %281 = vmatpush.msra.mxu0 %v36
    %282 = vmatpush.msra.mxu0 %v35
    %283 = vmatpush.msra.mxu0 %v34
    %284 = vmatpush.msra.mxu0 %v33
    %285 = vmatpush.msra.mxu0 %v32
    %286 = vmatpush.msra.mxu0 %v31
    %287 = vmatpush.msra.mxu0 %v30
    %288 = vmatpush.msra.mxu0 %v29
    %289 = vmatpush.msra.mxu0 %v28
    %290 = vmatpush.msra.mxu0 %v27
    %291 = vmatpush.msra.mxu0 %v26
    %292 = vmatpush.msra.mxu0 %v25
    %293 = vmatmul.f32.gmra.mxu0 %v276
    %v294 = vpop.f32.mrf.mxu0
    %v295 = vadd.f32 0.0, %v294
    %296 = vdwg.mxu0
    %v297 = vtanh.pop %v295
    %v298 = vmul.f32 %v297, 0.01
    %v299 = vadd.f32 %v276, %v298
    %300 = vmatpush.msra.mxu0 %v40
    %301 = vmatpush.msra.mxu0 %v39
    %302 = vmatpush.msra.mxu0 %v38
    %303 = vmatpush.msra.mxu0 %v37
    %304 = vmatpush.msra.mxu0 %v36
    %305 = vmatpush.msra.mxu0 %v35
    %306 = vmatpush.msra.mxu0 %v34
    %307 = vmatpush.msra.mxu0 %v33
    %308 = vmatpush.msra.mxu0 %v32
    %309 = vmatpush.msra.mxu0 %v31
    %310 = vmatpush.msra.mxu0 %v30
    %311 = vmatpush.msra.mxu0 %v29
    %312 = vmatpush.msra.mxu0 %v28
    %313 = vmatpush.msra.mxu0 %v27
    %314 = vmatpush.msra.mxu0 %v26
    %315 = vmatpush.msra.mxu0 %v25
    %316 = vmatmul.f32.gmra.mxu0 %v299
    %v317 = vpop.f32.mrf.mxu0
    %v318 = vadd.f32 0.0, %v317
    %319 = vdwg.mxu0
    %v320 = vtanh.pop %v318
    %v321 = vmul.f32 %v320, 0.01
    %v322 = vadd.f32 %v299, %v321
    %323 = vmatpush.msra.mxu0 %v40
    %324 = vmatpush.msra.mxu0 %v39
    %325 = vmatpush.msra.mxu0 %v38
    %326 = vmatpush.msra.mxu0 %v37
    %327 = vmatpush.msra.mxu0 %v36
    %328 = vmatpush.msra.mxu0 %v35
    %329 = vmatpush.msra.mxu0 %v34
    %330 = vmatpush.msra.mxu0 %v33
    %331 = vmatpush.msra.mxu0 %v32
    %332 = vmatpush.msra.mxu0 %v31
    %333 = vmatpush.msra.mxu0 %v30
    %334 = vmatpush.msra.mxu0 %v29
    %335 = vmatpush.msra.mxu0 %v28
    %336 = vmatpush.msra.mxu0 %v27
    %337 = vmatpush.msra.mxu0 %v26
    %338 = vmatpush.msra.mxu0 %v25
    %339 = vmatmul.f32.gmra.mxu0 %v322
    %v340 = vpop.f32.mrf.mxu0
    %v341 = vadd.f32 0.0, %v340
    %342 = vdwg.mxu0
    %v343 = vtanh.pop %v341
    %v344 = vmul.f32 %v343, 0.01
    %v345 = vadd.f32 %v322, %v344
    %346 = vmatpush.msra.mxu0 %v40
    %347 = vmatpush.msra.mxu0 %v39
    %348 = vmatpush.msra.mxu0 %v38
    %349 = vmatpush.msra.mxu0 %v37
    %350 = vmatpush.msra.mxu0 %v36
    %351 = vmatpush.msra.mxu0 %v35
    %352 = vmatpush.msra.mxu0 %v34
    %353 = vmatpush.msra.mxu0 %v33
    %354 = vmatpush.msra.mxu0 %v32
    %355 = vmatpush.msra.mxu0 %v31
    %356 = vmatpush.msra.mxu0 %v30
    %357 = vmatpush.msra.mxu0 %v29
    %358 = vmatpush.msra.mxu0 %v28
    %359 = vmatpush.msra.mxu0 %v27
    %360 = vmatpush.msra.mxu0 %v26
    %361 = vmatpush.msra.mxu0 %v25
    %362 = vmatmul.f32.gmra.mxu0 %v345
    %v363 = vpop.f32.mrf.mxu0
    %v364 = vadd.f32 0.0, %v363
    %365 = vdwg.mxu0
    %v366 = vtanh.pop %v364
    %v367 = vmul.f32 %v366, 0.01
    %v368 = vadd.f32 %v345, %v367
    %369 = vmatpush.msra.mxu0 %v40
    %370 = vmatpush.msra.mxu0 %v39
    %371 = vmatpush.msra.mxu0 %v38
    %372 = vmatpush.msra.mxu0 %v37
    %373 = vmatpush.msra.mxu0 %v36
    %374 = vmatpush.msra.mxu0 %v35
    %375 = vmatpush.msra.mxu0 %v34
    %376 = vmatpush.msra.mxu0 %v33
    %377 = vmatpush.msra.mxu0 %v32
    %378 = vmatpush.msra.mxu0 %v31
    %379 = vmatpush.msra.mxu0 %v30
    %380 = vmatpush.msra.mxu0 %v29
    %381 = vmatpush.msra.mxu0 %v28
    %382 = vmatpush.msra.mxu0 %v27
    %383 = vmatpush.msra.mxu0 %v26
    %384 = vmatpush.msra.mxu0 %v25
    %385 = vmatmul.f32.gmra.mxu0 %v368
    %v386 = vpop.f32.mrf.mxu0
    %v387 = vadd.f32 0.0, %v386
    %388 = vdwg.mxu0
    %v389 = vtanh.pop %v387
    %v390 = vmul.f32 %v389, 0.01
    %v391 = vadd.f32 %v368, %v390
    %392 = vmatpush.msra.mxu0 %v40
    %393 = vmatpush.msra.mxu0 %v39
    %394 = vmatpush.msra.mxu0 %v38
    %395 = vmatpush.msra.mxu0 %v37
    %396 = vmatpush.msra.mxu0 %v36
    %397 = vmatpush.msra.mxu0 %v35
    %398 = vmatpush.msra.mxu0 %v34
    %399 = vmatpush.msra.mxu0 %v33
    %400 = vmatpush.msra.mxu0 %v32
    %401 = vmatpush.msra.mxu0 %v31
    %402 = vmatpush.msra.mxu0 %v30
    %403 = vmatpush.msra.mxu0 %v29
    %404 = vmatpush.msra.mxu0 %v28
    %405 = vmatpush.msra.mxu0 %v27
    %406 = vmatpush.msra.mxu0 %v26
    %407 = vmatpush.msra.mxu0 %v25
    %408 = vmatmul.f32.gmra.mxu0 %v391
    %v409 = vpop.f32.mrf.mxu0
    %v410 = vadd.f32 0.0, %v409
    %411 = vdwg.mxu0
    %v412 = vtanh.pop %v410
    %v413 = vmul.f32 %v412, 0.01
    %v414 = vadd.f32 %v391, %v413
    %415 = vmatpush.msra.mxu0 %v40
    %416 = vmatpush.msra.mxu0 %v39
    %417 = vmatpush.msra.mxu0 %v38
    %418 = vmatpush.msra.mxu0 %v37
    %419 = vmatpush.msra.mxu0 %v36
    %420 = vmatpush.msra.mxu0 %v35
    %421 = vmatpush.msra.mxu0 %v34
    %422 = vmatpush.msra.mxu0 %v33
    %423 = vmatpush.msra.mxu0 %v32
    %424 = vmatpush.msra.mxu0 %v31
    %425 = vmatpush.msra.mxu0 %v30
    %426 = vmatpush.msra.mxu0 %v29
    %427 = vmatpush.msra.mxu0 %v28
    %428 = vmatpush.msra.mxu0 %v27
    %429 = vmatpush.msra.mxu0 %v26
    %430 = vmatpush.msra.mxu0 %v25
    %431 = vmatmul.f32.gmra.mxu0 %v414
    %v432 = vpop.f32.mrf.mxu0
    %v433 = vadd.f32 0.0, %v432
    %434 = vdwg.mxu0
    %v435 = vtanh.pop %v433
    %v436 = vmul.f32 %v435, 0.01
    %v437 = vadd.f32 %v414, %v436
    %438 = vmatpush.msra.mxu0 %v40
    %439 = vmatpush.msra.mxu0 %v39
    %440 = vmatpush.msra.mxu0 %v38
    %441 = vmatpush.msra.mxu0 %v37
    %442 = vmatpush.msra.mxu0 %v36
    %443 = vmatpush.msra.mxu0 %v35
    %444 = vmatpush.msra.mxu0 %v34
    %445 = vmatpush.msra.mxu0 %v33
    %446 = vmatpush.msra.mxu0 %v32
    %447 = vmatpush.msra.mxu0 %v31
    %448 = vmatpush.msra.mxu0 %v30
    %449 = vmatpush.msra.mxu0 %v29
    %450 = vmatpush.msra.mxu0 %v28
    %451 = vmatpush.msra.mxu0 %v27
    %452 = vmatpush.msra.mxu0 %v26
    %453 = vmatpush.msra.mxu0 %v25
    %454 = vmatmul.f32.gmra.mxu0 %v437
    %v455 = vpop.f32.mrf.mxu0
    %v456 = vadd.f32 0.0, %v455
    %457 = vdwg.mxu0
    %v458 = vtanh.pop %v456
    %v459 = vmul.f32 %v458, 0.01
    %v460 = vadd.f32 %v437, %v459
    %461 = vmatpush.msra.mxu0 %v40
    %462 = vmatpush.msra.mxu0 %v39
    %463 = vmatpush.msra.mxu0 %v38
    %464 = vmatpush.msra.mxu0 %v37
    %465 = vmatpush.msra.mxu0 %v36
    %466 = vmatpush.msra.mxu0 %v35
    %467 = vmatpush.msra.mxu0 %v34
    %468 = vmatpush.msra.mxu0 %v33
    %469 = vmatpush.msra.mxu0 %v32
    %470 = vmatpush.msra.mxu0 %v31
    %471 = vmatpush.msra.mxu0 %v30
    %472 = vmatpush.msra.mxu0 %v29
    %473 = vmatpush.msra.mxu0 %v28
    %474 = vmatpush.msra.mxu0 %v27
    %475 = vmatpush.msra.mxu0 %v26
    %476 = vmatpush.msra.mxu0 %v25
    %477 = vmatmul.f32.gmra.mxu0 %v460
    %v478 = vpop.f32.mrf.mxu0
    %v479 = vadd.f32 0.0, %v478
    %480 = vdwg.mxu0
    %v481 = vtanh.pop %v479
    %v482 = vmul.f32 %v481, 0.01
    %v483 = vadd.f32 %v460, %v482
    %484 = vmatpush.msra.mxu0 %v40
    %485 = vmatpush.msra.mxu0 %v39
    %486 = vmatpush.msra.mxu0 %v38
    %487 = vmatpush.msra.mxu0 %v37
    %488 = vmatpush.msra.mxu0 %v36
    %489 = vmatpush.msra.mxu0 %v35
    %490 = vmatpush.msra.mxu0 %v34
    %491 = vmatpush.msra.mxu0 %v33
    %492 = vmatpush.msra.mxu0 %v32
    %493 = vmatpush.msra.mxu0 %v31
    %494 = vmatpush.msra.mxu0 %v30
    %495 = vmatpush.msra.mxu0 %v29
    %496 = vmatpush.msra.mxu0 %v28
    %497 = vmatpush.msra.mxu0 %v27
    %498 = vmatpush.msra.mxu0 %v26
    %499 = vmatpush.msra.mxu0 %v25
    %500 = vmatmul.f32.gmra.mxu0 %v483
    %v501 = vpop.f32.mrf.mxu0
    %v502 = vadd.f32 0.0, %v501
    %503 = vdwg.mxu0
    %v504 = vtanh.pop %v502
    %v505 = vmul.f32 %v504, 0.01
    %v506 = vadd.f32 %v483, %v505
    %507 = vmatpush.msra.mxu0 %v40
    %508 = vmatpush.msra.mxu0 %v39
    %509 = vmatpush.msra.mxu0 %v38
    %510 = vmatpush.msra.mxu0 %v37
    %511 = vmatpush.msra.mxu0 %v36
    %512 = vmatpush.msra.mxu0 %v35
    %513 = vmatpush.msra.mxu0 %v34
    %514 = vmatpush.msra.mxu0 %v33
    %515 = vmatpush.msra.mxu0 %v32
    %516 = vmatpush.msra.mxu0 %v31
    %517 = vmatpush.msra.mxu0 %v30
    %518 = vmatpush.msra.mxu0 %v29
    %519 = vmatpush.msra.mxu0 %v28
    %520 = vmatpush.msra.mxu0 %v27
    %521 = vmatpush.msra.mxu0 %v26
    %522 = vmatpush.msra.mxu0 %v25
    %523 = vmatmul.f32.gmra.mxu0 %v506
    %v524 = vpop.f32.mrf.mxu0
    %v525 = vadd.f32 0.0, %v524
    %526 = vdwg.mxu0
    %v527 = vtanh.pop %v525
    %v528 = vmul.f32 %v527, 0.01
    %v529 = vadd.f32 %v506, %v528
    %530 = vmatpush.msra.mxu0 %v40
    %531 = vmatpush.msra.mxu0 %v39
    %532 = vmatpush.msra.mxu0 %v38
    %533 = vmatpush.msra.mxu0 %v37
    %534 = vmatpush.msra.mxu0 %v36
    %535 = vmatpush.msra.mxu0 %v35
    %536 = vmatpush.msra.mxu0 %v34
    %537 = vmatpush.msra.mxu0 %v33
    %538 = vmatpush.msra.mxu0 %v32
    %539 = vmatpush.msra.mxu0 %v31
    %540 = vmatpush.msra.mxu0 %v30
    %541 = vmatpush.msra.mxu0 %v29
    %542 = vmatpush.msra.mxu0 %v28
    %543 = vmatpush.msra.mxu0 %v27
    %544 = vmatpush.msra.mxu0 %v26
    %545 = vmatpush.msra.mxu0 %v25
    %546 = vmatmul.f32.gmra.mxu0 %v529
    %v547 = vpop.f32.mrf.mxu0
    %v548 = vadd.f32 0.0, %v547
    %549 = vdwg.mxu0
    %v550 = vtanh.pop %v548
    %v551 = vmul.f32 %v550, 0.01
    %v552 = vadd.f32 %v529, %v551
    %553 = vmatpush.msra.mxu0 %v40
    %554 = vmatpush.msra.mxu0 %v39
    %555 = vmatpush.msra.mxu0 %v38
    %556 = vmatpush.msra.mxu0 %v37
    %557 = vmatpush.msra.mxu0 %v36
    %558 = vmatpush.msra.mxu0 %v35
    %559 = vmatpush.msra.mxu0 %v34
    %560 = vmatpush.msra.mxu0 %v33
    %561 = vmatpush.msra.mxu0 %v32
    %562 = vmatpush.msra.mxu0 %v31
    %563 = vmatpush.msra.mxu0 %v30
    %564 = vmatpush.msra.mxu0 %v29
    %565 = vmatpush.msra.mxu0 %v28
    %566 = vmatpush.msra.mxu0 %v27
    %567 = vmatpush.msra.mxu0 %v26
    %568 = vmatpush.msra.mxu0 %v25
    %569 = vmatmul.f32.gmra.mxu0 %v552
    %v570 = vpop.f32.mrf.mxu0
    %v571 = vadd.f32 0.0, %v570
    %572 = vdwg.mxu0
    %v573 = vtanh.pop %v571
    %v574 = vmul.f32 %v573, 0.01
    %v575 = vadd.f32 %v552, %v574
    %576 = vmatpush.msra.mxu0 %v40
    %577 = vmatpush.msra.mxu0 %v39
    %578 = vmatpush.msra.mxu0 %v38
    %579 = vmatpush.msra.mxu0 %v37
    %580 = vmatpush.msra.mxu0 %v36
    %581 = vmatpush.msra.mxu0 %v35
    %582 = vmatpush.msra.mxu0 %v34
    %583 = vmatpush.msra.mxu0 %v33
    %584 = vmatpush.msra.mxu0 %v32
    %585 = vmatpush.msra.mxu0 %v31
    %586 = vmatpush.msra.mxu0 %v30
    %587 = vmatpush.msra.mxu0 %v29
    %588 = vmatpush.msra.mxu0 %v28
    %589 = vmatpush.msra.mxu0 %v27
    %590 = vmatpush.msra.mxu0 %v26
    %591 = vmatpush.msra.mxu0 %v25
    %592 = vmatmul.f32.gmra.mxu0 %v575
    %v593 = vpop.f32.mrf.mxu0
    %v594 = vadd.f32 0.0, %v593
    %595 = vdwg.mxu0
    %v596 = vtanh.pop %v594
    %v597 = vmul.f32 %v596, 0.01
    %v598 = vadd.f32 %v575, %v597
    %599 = vmatpush.msra.mxu0 %v40
    %600 = vmatpush.msra.mxu0 %v39
    %601 = vmatpush.msra.mxu0 %v38
    %602 = vmatpush.msra.mxu0 %v37
    %603 = vmatpush.msra.mxu0 %v36
    %604 = vmatpush.msra.mxu0 %v35
    %605 = vmatpush.msra.mxu0 %v34
    %606 = vmatpush.msra.mxu0 %v33
    %607 = vmatpush.msra.mxu0 %v32
    %608 = vmatpush.msra.mxu0 %v31
    %609 = vmatpush.msra.mxu0 %v30
    %610 = vmatpush.msra.mxu0 %v29
    %611 = vmatpush.msra.mxu0 %v28
    %612 = vmatpush.msra.mxu0 %v27
    %613 = vmatpush.msra.mxu0 %v26
    %614 = vmatpush.msra.mxu0 %v25
    %615 = vmatmul.f32.gmra.mxu0 %v598
    %v616 = vpop.f32.mrf.mxu0
    %v617 = vadd.f32 0.0, %v616
    %618 = vdwg.mxu0
    %v619 = vtanh.pop %v617
    %v620 = vmul.f32 %v619, 0.01
    %v621 = vadd.f32 %v598, %v620
    %622 = vmatpush.msra.mxu0 %v40
    %623 = vmatpush.msra.mxu0 %v39
    %624 = vmatpush.msra.mxu0 %v38
    %625 = vmatpush.msra.mxu0 %v37
    %626 = vmatpush.msra.mxu0 %v36
    %627 = vmatpush.msra.mxu0 %v35
    %628 = vmatpush.msra.mxu0 %v34
    %629 = vmatpush.msra.mxu0 %v33
    %630 = vmatpush.msra.mxu0 %v32
    %631 = vmatpush.msra.mxu0 %v31
    %632 = vmatpush.msra.mxu0 %v30
    %633 = vmatpush.msra.mxu0 %v29
    %634 = vmatpush.msra.mxu0 %v28
    %635 = vmatpush.msra.mxu0 %v27
    %636 = vmatpush.msra.mxu0 %v26
    %637 = vmatpush.msra.mxu0 %v25
    %638 = vmatmul.f32.gmra.mxu0 %v621
    %v639 = vpop.f32.mrf.mxu0
    %v640 = vadd.f32 0.0, %v639
    %641 = vdwg.mxu0
    %v642 = vtanh.pop %v640
    %v643 = vmul.f32 %v642, 0.01
    %v644 = vadd.f32 %v621, %v643
    %645 = vmatpush.msra.mxu0 %v40
    %646 = vmatpush.msra.mxu0 %v39
    %647 = vmatpush.msra.mxu0 %v38
    %648 = vmatpush.msra.mxu0 %v37
    %649 = vmatpush.msra.mxu0 %v36
    %650 = vmatpush.msra.mxu0 %v35
    %651 = vmatpush.msra.mxu0 %v34
    %652 = vmatpush.msra.mxu0 %v33
    %653 = vmatpush.msra.mxu0 %v32
    %654 = vmatpush.msra.mxu0 %v31
    %655 = vmatpush.msra.mxu0 %v30
    %656 = vmatpush.msra.mxu0 %v29
    %657 = vmatpush.msra.mxu0 %v28
    %658 = vmatpush.msra.mxu0 %v27
    %659 = vmatpush.msra.mxu0 %v26
    %660 = vmatpush.msra.mxu0 %v25
    %661 = vmatmul.f32.gmra.mxu0 %v644
    %v662 = vpop.f32.mrf.mxu0
    %v663 = vadd.f32 0.0, %v662
    %664 = vdwg.mxu0
    %v665 = vtanh.pop %v663
    %v666 = vmul.f32 %v665, 0.01
    %v667 = vadd.f32 %v644, %v666
    %668 = vmatpush.msra.mxu0 %v40
    %669 = vmatpush.msra.mxu0 %v39
    %670 = vmatpush.msra.mxu0 %v38
    %671 = vmatpush.msra.mxu0 %v37
    %672 = vmatpush.msra.mxu0 %v36
    %673 = vmatpush.msra.mxu0 %v35
    %674 = vmatpush.msra.mxu0 %v34
    %675 = vmatpush.msra.mxu0 %v33
    %676 = vmatpush.msra.mxu0 %v32
    %677 = vmatpush.msra.mxu0 %v31
    %678 = vmatpush.msra.mxu0 %v30
    %679 = vmatpush.msra.mxu0 %v29
    %680 = vmatpush.msra.mxu0 %v28
    %681 = vmatpush.msra.mxu0 %v27
    %682 = vmatpush.msra.mxu0 %v26
    %683 = vmatpush.msra.mxu0 %v25
    %684 = vmatmul.f32.gmra.mxu0 %v667
    %v685 = vpop.f32.mrf.mxu0
    %v686 = vadd.f32 0.0, %v685
    %687 = vdwg.mxu0
    %v688 = vtanh.pop %v686
    %v689 = vmul.f32 %v688, 0.01
    %v690 = vadd.f32 %v667, %v689
    %691 = vmatpush.msra.mxu0 %v40
    %692 = vmatpush.msra.mxu0 %v39
    %693 = vmatpush.msra.mxu0 %v38
    %694 = vmatpush.msra.mxu0 %v37
    %695 = vmatpush.msra.mxu0 %v36
    %696 = vmatpush.msra.mxu0 %v35
    %697 = vmatpush.msra.mxu0 %v34
    %698 = vmatpush.msra.mxu0 %v33
    %699 = vmatpush.msra.mxu0 %v32
    %700 = vmatpush.msra.mxu0 %v31
    %701 = vmatpush.msra.mxu0 %v30
    %702 = vmatpush.msra.mxu0 %v29
    %703 = vmatpush.msra.mxu0 %v28
    %704 = vmatpush.msra.mxu0 %v27
    %705 = vmatpush.msra.mxu0 %v26
    %706 = vmatpush.msra.mxu0 %v25
    %707 = vmatmul.f32.gmra.mxu0 %v690
    %v708 = vpop.f32.mrf.mxu0
    %v709 = vadd.f32 0.0, %v708
    %710 = vdwg.mxu0
    %v711 = vtanh.pop %v709
    %v712 = vmul.f32 %v711, 0.01
    %v713 = vadd.f32 %v690, %v712
    %714 = vmatpush.msra.mxu0 %v40
    %715 = vmatpush.msra.mxu0 %v39
    %716 = vmatpush.msra.mxu0 %v38
    %717 = vmatpush.msra.mxu0 %v37
    %718 = vmatpush.msra.mxu0 %v36
    %719 = vmatpush.msra.mxu0 %v35
    %720 = vmatpush.msra.mxu0 %v34
    %721 = vmatpush.msra.mxu0 %v33
    %722 = vmatpush.msra.mxu0 %v32
    %723 = vmatpush.msra.mxu0 %v31
    %724 = vmatpush.msra.mxu0 %v30
    %725 = vmatpush.msra.mxu0 %v29
    %726 = vmatpush.msra.mxu0 %v28
    %727 = vmatpush.msra.mxu0 %v27
    %728 = vmatpush.msra.mxu0 %v26
    %729 = vmatpush.msra.mxu0 %v25
    %730 = vmatmul.f32.gmra.mxu0 %v713
    %v731 = vpop.f32.mrf.mxu0
    %v732 = vadd.f32 0.0, %v731
    %733 = vdwg.mxu0
    %v734 = vtanh.pop %v732
    %v735 = vmul.f32 %v734, 0.01
    %v736 = vadd.f32 %v713, %v735
    %737 = vst [vmem:[#allocation5] sm:$0xff] %v736
    // Predicated region
    $region10: #{tpu_custom_call.1} parent=1 // pred_check
      _
    $region11: #{tpu_custom_call.1} parent=1 // pred_check_branch
      %739 = sbr.rel (0) target = $region13
    $region12: #{tpu_custom_call.1} parent=1 // pred_region
      %741 = vsyncadd [#allocation4], 0
      %s743 = sshll.u32 [#allocation5], 4
      %s744 = int_to_ptr.vmem [resolvable:$true] %s743
      %s745 = sshll.u32 %s1, 4
      %s746 = int_to_ptr.hbm [resolvable:$true] %s745
      %748 = dma.vmem_to_hbm [thread:$0]  %s744, 128, %s746, [#allocation4]
    $region13: #{tpu_custom_call.1} parent=1 // pred_fallthru
      _
    // Predicated region
    $region14: #{tpu_custom_call.1} parent=1 // pred_check
      _
    $region15: #{tpu_custom_call.1} parent=1 // pred_check_branch
      %750 = sbr.rel (0) target = $region17
    $region16: #{tpu_custom_call.1} parent=1 // pred_region
      %752 = dma.done [#allocation4], 128
    $region17: #{tpu_custom_call.1} parent=1 // pred_fallthru
      _
    %753 = vsyncpa [#allocation3], 1
    %754 = vsyncpa [#allocation4], 1

</llo_original>
